<compile_context>
chip_gen: v7x
topology: tpu7x:2x2x1
jax: 0.10.0
libtpu: 0.0.40
codegen_flags: <defaults>
</compile_context>

<pallas_src>
import jax
import jax.numpy as jnp
from jax.experimental import pallas as pl
from jax.experimental.pallas import tpu as pltpu


def _softplus(v):
    # Matches torch.nn.Softplus(beta=1, threshold=20):
    #   x            if x > 20
    #   log1p(exp(x)) otherwise
    safe = jnp.where(v > 20.0, 0.0, v)
    return jnp.where(v > 20.0, v, jnp.log1p(jnp.exp(safe)))


def _make_decoder_kernel(y_dim):
    """Kernel closure; y_dim is a static Python int (softplus column mask)."""

    def kernel(zx_ref, w1_ref, b1_ref, w2_ref, b2_ref, out_ref):
        # Fused input projection: [TB, z+x] @ blockdiag(wz, wx) -> [TB, 2H]
        h = jnp.dot(zx_ref[...], w1_ref[...],
                    preferred_element_type=jnp.float32) + b1_ref[...]
        h = _softplus(h)

        # Fused output heads: [TB, 2H] @ [2H, Ypad] -> [TB, Ypad]
        # columns [0, y)      = mu
        # columns [y, 2y)     = pre-softplus sigma
        # columns [2y, Ypad)  = zero padding (sliced off in the wrapper)
        o = jnp.dot(h.astype(jnp.bfloat16), w2_ref[...],
                    preferred_element_type=jnp.float32) + b2_ref[...]

        # Apply softplus only to the sigma (and pad) columns via a lane mask;
        # avoids any in-kernel slicing of the output tile.
        col = jax.lax.broadcasted_iota(jnp.int32, o.shape, 1)
        out_ref[...] = jnp.where(col >= y_dim, _softplus(o), o)

    return kernel


def pack_decoder_params(params):
    """Host-side (one-time) packing of the logical Linear params into the
    fused / padded / bf16 layout the kernel consumes."""
    wz, wx = params["wz"], params["wx"]          # [z_dim, H], [x_dim, H]
    z_dim, H = wz.shape
    x_dim = wx.shape[0]
    y_dim = params["w21"].shape[1]
    kin = z_dim + x_dim
    h2 = 2 * H
    ypad = max(128, ((2 * y_dim + 127) // 128) * 128)

    # Block-diagonal fused input-projection weight: concat(z,x) @ w1 ==
    # [fcz(z) | fcx(x)]  (zeros in the off-diagonal blocks).
    w1 = jnp.zeros((kin, h2), jnp.float32)
    w1 = w1.at[:z_dim, :H].set(wz)
    w1 = w1.at[z_dim:, H:].set(wx)
    b1 = jnp.concatenate([params["bz"], params["bx"]], axis=1)      # [1, 2H]

    # Fused + lane-padded output head weight: hidden @ w2 == [mu | pre_sigma | 0]
    w2 = jnp.concatenate([params["w21"], params["w22"]], axis=1)    # [2H, 2y]
    w2 = jnp.pad(w2, ((0, 0), (0, ypad - 2 * y_dim)))
    b2 = jnp.concatenate([params["b21"], params["b22"]], axis=1)    # [1, 2y]
    b2 = jnp.pad(b2, ((0, 0), (0, ypad - 2 * y_dim)))

    return {
        "w1": w1.astype(jnp.bfloat16),
        "b1": b1.astype(jnp.float32),
        "w2": w2.astype(jnp.bfloat16),
        "b2": b2.astype(jnp.float32),
        "y_dim": int(y_dim),
    }


def decoder_forward(z, x, packed, *, tile_b=128):
    """Run the fused decoder kernel. Returns (mu, sigma)."""
    B = z.shape[0]
    kin = z.shape[1] + x.shape[1]
    h2 = packed["w1"].shape[1]
    ypad = packed["w2"].shape[1]
    y_dim = packed["y_dim"]

    # Activations in bf16 for the MXU (f32 accumulation inside the kernel).
    zx = jnp.concatenate([z, x], axis=1).astype(jnp.bfloat16)       # [B, z+x]

    # Batch tile: full batch if it fits, otherwise a multiple of 8 rows.
    tb = min(tile_b, B)
    if tb < B:
        tb = max(8, (tb // 8) * 8)
    grid = (pl.cdiv(B, tb),)

    out = pl.pallas_call(
        _make_decoder_kernel(y_dim),
        out_shape=jax.ShapeDtypeStruct((B, ypad), jnp.float32),
        grid=grid,
        in_specs=[
            pl.BlockSpec((tb, kin), lambda i: (i, 0)),      # activations: tiled over batch
            pl.BlockSpec((kin, h2), lambda i: (0, 0)),      # fused W1: resident
            pl.BlockSpec((1, h2), lambda i: (0, 0)),        # fused b1: resident
            pl.BlockSpec((h2, ypad), lambda i: (0, 0)),     # fused W2: resident
            pl.BlockSpec((1, ypad), lambda i: (0, 0)),      # fused b2: resident
        ],
        out_specs=pl.BlockSpec((tb, ypad), lambda i: (i, 0)),
        compiler_params=pltpu.CompilerParams(
            dimension_semantics=("parallel",)),
    )(zx, packed["w1"], packed["b1"], packed["w2"], packed["b2"])

    mu = out[:, :y_dim]
    sigma = out[:, y_dim:2 * y_dim]
    return mu, sigma


def xavier_uniform(key, out_features, in_features):
    # torch.nn.init.xavier_uniform_ on a [out, in] Linear weight
    bound = jnp.sqrt(6.0 / (in_features + out_features))
    w_torch = jax.random.uniform(key, (out_features, in_features),
                                 jnp.float32, -bound, bound)
    return w_torch.T  # stored transposed: [in, out]


def make_params(key, z_dim, hidden_dim, y_dim, x_dim):
    k1, k2, k3, k4 = jax.random.split(key, 4)
    return {
        "wx": xavier_uniform(k1, hidden_dim, x_dim),
        "bx": jnp.zeros((1, hidden_dim), jnp.float32),
        "wz": xavier_uniform(k2, hidden_dim, z_dim),
        "bz": jnp.zeros((1, hidden_dim), jnp.float32),
        "w21": xavier_uniform(k3, y_dim, 2 * hidden_dim),
        "b21": jnp.zeros((1, y_dim), jnp.float32),
        "w22": xavier_uniform(k4, y_dim, 2 * hidden_dim),
        "b22": jnp.zeros((1, y_dim), jnp.float32),
    }


def reference_forward(z, x, params):
    """Pure-JAX f32 reference mirroring the PyTorch forward."""
    sp = lambda v: jnp.where(v > 20.0, v,
                             jnp.log1p(jnp.exp(jnp.where(v > 20.0, 0.0, v))))
    hz = z @ params["wz"] + params["bz"]
    hx = x @ params["wx"] + params["bx"]
    hidden = sp(jnp.concatenate([hz, hx], axis=1))
    mu = hidden @ params["w21"] + params["b21"]
    sigma = sp(hidden @ params["w22"] + params["b22"])
    return mu, sigma


if __name__ == "__main__":
    B, z_dim, x_dim, hidden_dim, y_dim = 16, 4, 6, 32, 16

    key = jax.random.PRNGKey(0)
    kz, kx, kp = jax.random.split(key, 3)
    z = jax.random.normal(kz, (B, z_dim), jnp.float32)
    x = jax.random.normal(kx, (B, x_dim), jnp.float32)
    params = make_params(kp, z_dim, hidden_dim, y_dim, x_dim)

    packed = pack_decoder_params(params)         # one-time host-side packing
    mu, sigma = decoder_forward(z, x, packed, tile_b=8)  # grid of 2 batch tiles
    jax.block_until_ready((mu, sigma))

    # Relaxed tolerance vs. the f32 reference: MXU operands are bf16.
    mu_ref, sigma_ref = reference_forward(z, x, params)
    assert jnp.allclose(mu, mu_ref, atol=5e-2, rtol=5e-2), \
        float(jnp.max(jnp.abs(mu - mu_ref)))
    assert jnp.allclose(sigma, sigma_ref, atol=5e-2, rtol=5e-2), \
        float(jnp.max(jnp.abs(sigma - sigma_ref)))

    print("KERNEL_OK")
</pallas_src>

<mosaic_0001>
module attributes {stable_mosaic.version = 11 : i64} {
  func.func @kernel(%arg0: i32, %arg1: memref<8x10xbf16, #tpu.memory_space<vmem>>, %arg2: memref<10x64xbf16, #tpu.memory_space<vmem>>, %arg3: memref<1x64xf32, #tpu.memory_space<vmem>>, %arg4: memref<64x128xbf16, #tpu.memory_space<vmem>>, %arg5: memref<1x128xf32, #tpu.memory_space<vmem>>, %arg6: memref<8x128xf32, #tpu.memory_space<vmem>>) attributes {dimension_semantics = [#tpu.dimension_semantics<parallel>], iteration_bounds = array<i64: 2>, scalar_prefetch = 0 : i64, scratch_operands = 0 : i64, tpu.core_type = #tpu.core_type<tc>, window_params = [{transform_indices = @transform_0, window_bounds = array<i64: 8, 10>}, {pipeline_mode = #tpu.pipeline_mode<synchronous>, transform_indices = @transform_1, window_bounds = array<i64: 10, 64>}, {pipeline_mode = #tpu.pipeline_mode<synchronous>, transform_indices = @transform_2, window_bounds = array<i64: 1, 64>}, {pipeline_mode = #tpu.pipeline_mode<synchronous>, transform_indices = @transform_3, window_bounds = array<i64: 64, 128>}, {pipeline_mode = #tpu.pipeline_mode<synchronous>, transform_indices = @transform_4, window_bounds = array<i64: 1, 128>}, {transform_indices = @transform_5, window_bounds = array<i64: 8, 128>}]} {
    %c0 = arith.constant 0 : index
    %c0_0 = arith.constant 0 : index
    %0 = vector.load %arg1[%c0, %c0_0] : memref<8x10xbf16, #tpu.memory_space<vmem>>, vector<8x10xbf16>
    %c0_1 = arith.constant 0 : index
    %c0_2 = arith.constant 0 : index
    %1 = vector.load %arg2[%c0_1, %c0_2] : memref<10x64xbf16, #tpu.memory_space<vmem>>, vector<10x64xbf16>
    %cst = arith.constant dense<0.000000e+00> : vector<8x64xf32>
    %2 = tpu.matmul %0, %1, %cst {dimension_numbers = #tpu.dot_dimension_numbers<[1], [0], [0], [1], [0, 0, 1, 1], [], []>} : vector<8x10xbf16>, vector<10x64xbf16>, vector<8x64xf32> -> vector<8x64xf32>
    %c0_3 = arith.constant 0 : index
    %c0_4 = arith.constant 0 : index
    %3 = vector.load %arg3[%c0_3, %c0_4] : memref<1x64xf32, #tpu.memory_space<vmem>>, vector<1x64xf32>
    %4 = vector.broadcast %3 : vector<1x64xf32> to vector<8x64xf32>
    %5 = arith.addf %2, %4 : vector<8x64xf32>
    %cst_5 = arith.constant 2.000000e+01 : f32
    %6 = vector.broadcast %cst_5 : f32 to vector<8x64xf32>
    %7 = arith.cmpf ogt, %5, %6 : vector<8x64xf32>
    %cst_6 = arith.constant 0.000000e+00 : f32
    %8 = vector.broadcast %cst_6 : f32 to vector<8x64xf32>
    %9 = arith.select %7, %8, %5 : vector<8x64xi1>, vector<8x64xf32>
    %cst_7 = arith.constant 2.000000e+01 : f32
    %10 = vector.broadcast %cst_7 : f32 to vector<8x64xf32>
    %11 = arith.cmpf ogt, %5, %10 : vector<8x64xf32>
    %12 = math.exp %9 : vector<8x64xf32>
    %13 = math.log1p %12 : vector<8x64xf32>
    %14 = arith.select %11, %5, %13 : vector<8x64xi1>, vector<8x64xf32>
    %15 = arith.truncf %14 : vector<8x64xf32> to vector<8x64xbf16>
    %c0_8 = arith.constant 0 : index
    %c0_9 = arith.constant 0 : index
    %16 = vector.load %arg4[%c0_8, %c0_9] : memref<64x128xbf16, #tpu.memory_space<vmem>>, vector<64x128xbf16>
    %cst_10 = arith.constant dense<0.000000e+00> : vector<8x128xf32>
    %17 = tpu.matmul %15, %16, %cst_10 {dimension_numbers = #tpu.dot_dimension_numbers<[1], [0], [0], [1], [0, 0, 1, 1], [], []>} : vector<8x64xbf16>, vector<64x128xbf16>, vector<8x128xf32> -> vector<8x128xf32>
    %c0_11 = arith.constant 0 : index
    %c0_12 = arith.constant 0 : index
    %18 = vector.load %arg5[%c0_11, %c0_12] : memref<1x128xf32, #tpu.memory_space<vmem>>, vector<1x128xf32>
    %19 = vector.broadcast %18 : vector<1x128xf32> to vector<8x128xf32>
    %20 = arith.addf %17, %19 : vector<8x128xf32>
    %21 = tpu.iota {dimensions = array<i32: 1>} : vector<8x128xi32>
    %c16_i32 = arith.constant 16 : i32
    %22 = vector.broadcast %c16_i32 : i32 to vector<8x128xi32>
    %23 = arith.cmpi sge, %21, %22 : vector<8x128xi32>
    %cst_13 = arith.constant 2.000000e+01 : f32
    %24 = vector.broadcast %cst_13 : f32 to vector<8x128xf32>
    %25 = arith.cmpf ogt, %20, %24 : vector<8x128xf32>
    %cst_14 = arith.constant 0.000000e+00 : f32
    %26 = vector.broadcast %cst_14 : f32 to vector<8x128xf32>
    %27 = arith.select %25, %26, %20 : vector<8x128xi1>, vector<8x128xf32>
    %cst_15 = arith.constant 2.000000e+01 : f32
    %28 = vector.broadcast %cst_15 : f32 to vector<8x128xf32>
    %29 = arith.cmpf ogt, %20, %28 : vector<8x128xf32>
    %30 = math.exp %27 : vector<8x128xf32>
    %31 = math.log1p %30 : vector<8x128xf32>
    %32 = arith.select %29, %20, %31 : vector<8x128xi1>, vector<8x128xf32>
    %33 = arith.select %23, %32, %20 : vector<8x128xi1>, vector<8x128xf32>
    %c0_16 = arith.constant 0 : index
    %c0_17 = arith.constant 0 : index
    %34 = vector.load %arg6[%c0_16, %c0_17] : memref<8x128xf32, #tpu.memory_space<vmem>>, vector<8x128xf32>
    tpu.vector_store %arg6[%c0_16, %c0_17], %33 {strides = array<i32>} : memref<8x128xf32, #tpu.memory_space<vmem>>, vector<8x128xf32>,
    return
  }
  func.func @transform_0(%arg0: i32) -> (i32, i32) {
    %c0_i32 = arith.constant 0 : i32
    %c0_i32_0 = arith.constant 0 : i32
    return %arg0, %c0_i32 : i32, i32
  }
  func.func @transform_1(%arg0: i32) -> (i32, i32) {
    %c0_i32 = arith.constant 0 : i32
    %c0_i32_0 = arith.constant 0 : i32
    %c0_i32_1 = arith.constant 0 : i32
    return %c0_i32, %c0_i32_0 : i32, i32
  }
  func.func @transform_2(%arg0: i32) -> (i32, i32) {
    %c0_i32 = arith.constant 0 : i32
    %c0_i32_0 = arith.constant 0 : i32
    %c0_i32_1 = arith.constant 0 : i32
    return %c0_i32, %c0_i32_0 : i32, i32
  }
  func.func @transform_3(%arg0: i32) -> (i32, i32) {
    %c0_i32 = arith.constant 0 : i32
    %c0_i32_0 = arith.constant 0 : i32
    %c0_i32_1 = arith.constant 0 : i32
    return %c0_i32, %c0_i32_0 : i32, i32
  }
  func.func @transform_4(%arg0: i32) -> (i32, i32) {
    %c0_i32 = arith.constant 0 : i32
    %c0_i32_0 = arith.constant 0 : i32
    %c0_i32_1 = arith.constant 0 : i32
    return %c0_i32, %c0_i32_0 : i32, i32
  }
  func.func @transform_5(%arg0: i32) -> (i32, i32) {
    %c0_i32 = arith.constant 0 : i32
    %c0_i32_0 = arith.constant 0 : i32
    return %arg0, %c0_i32 : i32, i32
  }
}

</mosaic_0001>

<llo_original>
// kernel: tpu_custom_call.1
$region0: #{tpu_custom_call.1}
  #allocation0 [shape = 'u32[]', space=smem, size = 0x4, offset = 0x4, fixed_abs, tag = 'smem constant byte address 0x4 - core index']
  #allocation1 [shape = 'u32[144,128]{1,0:T(1,128)}', space=vmem, size = 0x12000, scoped, tag = 'internal scratch']
  %s0 = inlined_call_operand.hbm [shape: bf16[16,10], index: 0, kind: input, shape index: {}]
  %s1 = inlined_call_operand.hbm [shape: bf16[10,64], index: 1, kind: input, shape index: {}]
  %s2 = inlined_call_operand.vmem [shape: f32[1,64], index: 2, kind: input, shape index: {}]
  %s3 = inlined_call_operand.hbm [shape: bf16[64,128], index: 3, kind: input, shape index: {}]
  %s4 = inlined_call_operand.vmem [shape: f32[1,128], index: 4, kind: input, shape index: {}]
  %s5 = inlined_call_operand.hbm [shape: f32[16,128], index: 5, kind: output, shape index: {}]
  %s6 = sld [smem:[#allocation0]]
  $region65: #{tpu_custom_call.1} parent=0
    _
  %s8 = ssub.s32 1, %s6
  %s9 = scalar_select 0, %s8, %s6
  $region1: #{tpu_custom_call.1} parent=0
    #allocation2 [shape = 'u8[4096]{0}', space=vmem, size = 0x1000, scoped, tag = 'input window, operand 0']
    #allocation3 [shape = 's32[2]{0}', space=sflag, size = 0x8, scoped, tag = 'scoped memory for tpu_custom_call.1']
    #allocation4 [shape = 's32[2]{0}', space=sflag, size = 0x8, scoped, tag = 'scoped memory for tpu_custom_call.1']
    #allocation5 [shape = 'u8[4096]{0}', space=vmem, size = 0x1000, scoped, tag = 'input window, operand 1, single buffered']
    #allocation6 [shape = 's32[1]{0}', space=sflag, size = 0x4, scoped, tag = 'scoped memory for tpu_custom_call.1']
    #allocation7 [shape = 'u8[16384]{0}', space=vmem, size = 0x4000, scoped, tag = 'input window, operand 3, single buffered']
    #allocation8 [shape = 'u8[8192]{0}', space=vmem, size = 0x2000, scoped, tag = 'output window, operand 0']
    %10 = vsyncpa [#allocation3], 0
    %s11 = scalar_lea.sflag [#allocation3], 1
    %12 = vsyncpa %s11, 0
    %13 = vsyncpa [#allocation6], 0
    %14 = vsyncpa [#allocation4], 0
    %s15 = scalar_lea.sflag [#allocation4], 1
    %16 = vsyncpa %s15, 0
    loop: start=0, step=1, limit=4
    $region2: #{tpu_custom_call.1} parent=1 // loop_pre_header
      _
    $region3: #{tpu_custom_call.1} parent=1 // loop_header
      %s18 = sphi 0, %s22
      %p19 = scmp.ge.s32.totalorder %s18, 4
      %s28 = sphi 0, %s30
      %s31 = sphi 0, %s28
      %s32 = sphi 0, %s31
      %s48 = sphi 0, %s32
      %s52 = sphi 0, %s52
      %s54 = sphi 0, %s52
      %s55 = sphi 0, %s54
      %s69 = sphi 0, %s55
      %s73 = sphi 0, %s73
      %s75 = sphi 0, %s73
      %s76 = sphi 0, %s75
      %s90 = sphi 0, %s76
      %s94 = sphi 0, %s94
      %s96 = sphi 0, %s94
      %s97 = sphi 0, %s96
      %s111 = sphi 0, %s97
      %s115 = sphi 0, %s115
      %s117 = sphi 0, %s115
      %s118 = sphi 0, %s117
      %s132 = sphi 0, %s118
      %s138 = sphi 0, %s140
      %s141 = sphi 0, %s138
      %s142 = sphi 0, %s141
      %s158 = sphi 0, %s142
    $region4: #{tpu_custom_call.1} parent=1 // loop_header_branch
      %21 = sbr.rel (%p19) target = $region8
    $region5: #{tpu_custom_call.1} parent=1 // loop_body
      %s23 = ssub.s32 %s18, 1
      %s24 = ssub.s32 %s18, 2
      %s25 = sadd.s32 %s18, 1
      %s26 = ssub.s32 %s18, %s25
      %p27 = scmp.eq.s32.totalorder %s26, 0
      %s29 = sadd.s32 %s28, 1
      %s30 = scalar_select %p27, %s28, %s29
      %p33 = pneg %p27
      %p34 = scmp.eq.s32.totalorder %s18, 1
      %p35 = por %p33, %p34
      %p36 = scmp.ne.s32.totalorder %s28, %s31
      %p37 = scmp.eq.s32.totalorder %s18, 0
      %p38 = por %p36, %p37
      %p39 = scmp.ne.s32.totalorder %s28, %s31
      %p40 = scmp.eq.s32.totalorder %s23, 1
      %p41 = por %p39, %p40
      %p42 = scmp.ne.s32.totalorder %s31, %s32
      %p43 = scmp.eq.s32.totalorder %s23, 0
      %p44 = por %p42, %p43
      %p45 = scmp.ne.s32.totalorder %s31, %s32
      %p46 = scmp.eq.s32.totalorder %s24, 1
      %p47 = por %p45, %p46
      %p49 = scmp.ne.s32.totalorder %s32, %s48
      %p50 = scmp.eq.s32.totalorder %s24, 0
      %p51 = por %p49, %p50
      %s53 = sadd.s32 %s52, 1
      %p56 = scmp.eq.s32.totalorder %s18, 1
      %p57 = scmp.ne.s32.totalorder %s52, %s54
      %p58 = scmp.eq.s32.totalorder %s18, 0
      %p59 = por %p57, %p58
      %p60 = scmp.ne.s32.totalorder %s52, %s54
      %p61 = scmp.eq.s32.totalorder %s23, 1
      %p62 = por %p60, %p61
      %p63 = scmp.ne.s32.totalorder %s54, %s55
      %p64 = scmp.eq.s32.totalorder %s23, 0
      %p65 = por %p63, %p64
      %p66 = scmp.ne.s32.totalorder %s54, %s55
      %p67 = scmp.eq.s32.totalorder %s24, 1
      %p68 = por %p66, %p67
      %p70 = scmp.ne.s32.totalorder %s55, %s69
      %p71 = scmp.eq.s32.totalorder %s24, 0
      %p72 = por %p70, %p71
      %s74 = sadd.s32 %s73, 1
      %p77 = scmp.eq.s32.totalorder %s18, 1
      %p78 = scmp.ne.s32.totalorder %s73, %s75
      %p79 = scmp.eq.s32.totalorder %s18, 0
      %p80 = por %p78, %p79
      %p81 = scmp.ne.s32.totalorder %s73, %s75
      %p82 = scmp.eq.s32.totalorder %s23, 1
      %p83 = por %p81, %p82
      %p84 = scmp.ne.s32.totalorder %s75, %s76
      %p85 = scmp.eq.s32.totalorder %s23, 0
      %p86 = por %p84, %p85
      %p87 = scmp.ne.s32.totalorder %s75, %s76
      %p88 = scmp.eq.s32.totalorder %s24, 1
      %p89 = por %p87, %p88
      %p91 = scmp.ne.s32.totalorder %s76, %s90
      %p92 = scmp.eq.s32.totalorder %s24, 0
      %p93 = por %p91, %p92
      %s95 = sadd.s32 %s94, 1
      %p98 = scmp.eq.s32.totalorder %s18, 1
      %p99 = scmp.ne.s32.totalorder %s94, %s96
      %p100 = scmp.eq.s32.totalorder %s18, 0
      %p101 = por %p99, %p100
      %p102 = scmp.ne.s32.totalorder %s94, %s96
      %p103 = scmp.eq.s32.totalorder %s23, 1
      %p104 = por %p102, %p103
      %p105 = scmp.ne.s32.totalorder %s96, %s97
      %p106 = scmp.eq.s32.totalorder %s23, 0
      %p107 = por %p105, %p106
      %p108 = scmp.ne.s32.totalorder %s96, %s97
      %p109 = scmp.eq.s32.totalorder %s24, 1
      %p110 = por %p108, %p109
      %p112 = scmp.ne.s32.totalorder %s97, %s111
      %p113 = scmp.eq.s32.totalorder %s24, 0
      %p114 = por %p112, %p113
      %s116 = sadd.s32 %s115, 1
      %p119 = scmp.eq.s32.totalorder %s18, 1
      %p120 = scmp.ne.s32.totalorder %s115, %s117
      %p121 = scmp.eq.s32.totalorder %s18, 0
      %p122 = por %p120, %p121
      %p123 = scmp.ne.s32.totalorder %s115, %s117
      %p124 = scmp.eq.s32.totalorder %s23, 1
      %p125 = por %p123, %p124
      %p126 = scmp.ne.s32.totalorder %s117, %s118
      %p127 = scmp.eq.s32.totalorder %s23, 0
      %p128 = por %p126, %p127
      %p129 = scmp.ne.s32.totalorder %s117, %s118
      %p130 = scmp.eq.s32.totalorder %s24, 1
      %p131 = por %p129, %p130
      %p133 = scmp.ne.s32.totalorder %s118, %s132
      %p134 = scmp.eq.s32.totalorder %s24, 0
      %p135 = por %p133, %p134
      %s136 = ssub.s32 %s18, %s25
      %p137 = scmp.eq.s32.totalorder %s136, 0
      %s139 = sadd.s32 %s138, 1
      %s140 = scalar_select %p137, %s138, %s139
      %p143 = pneg %p137
      %p144 = scmp.eq.s32.totalorder %s18, 1
      %p145 = por %p143, %p144
      %p146 = scmp.ne.s32.totalorder %s138, %s141
      %p147 = scmp.eq.s32.totalorder %s18, 0
      %p148 = por %p146, %p147
      %p149 = scmp.ne.s32.totalorder %s138, %s141
      %p150 = scmp.eq.s32.totalorder %s23, 1
      %p151 = por %p149, %p150
      %p152 = scmp.ne.s32.totalorder %s141, %s142
      %p153 = scmp.eq.s32.totalorder %s23, 0
      %p154 = por %p152, %p153
      %p155 = scmp.ne.s32.totalorder %s141, %s142
      %p156 = scmp.eq.s32.totalorder %s24, 1
      %p157 = por %p155, %p156
      %p159 = scmp.ne.s32.totalorder %s142, %s158
      %p160 = scmp.eq.s32.totalorder %s24, 0
      %p161 = por %p159, %p160
      %p162 = scmp.le.s32.totalorder 1, %s18
      %p163 = scmp.lt.s32.totalorder %s18, 3
      %p164 = pnand %p162, %p163
      %p165 = pneg %p164
      // Predicated region
      $region9: #{tpu_custom_call.1} parent=5 // pred_check
        _
      $region10: #{tpu_custom_call.1} parent=5 // pred_check_branch
        %167 = sbr.rel (%p164) target = $region12
      $region11: #{tpu_custom_call.1} parent=5 // pred_region
        %s168 = ssub.s32 %s18, 1
        // Predicated region
        $region13: #{tpu_custom_call.1} parent=11 // pred_check
          %p169 = pneg %p65
        $region14: #{tpu_custom_call.1} parent=11 // pred_check_branch
          %171 = sbr.rel (%p169) target = $region16
        $region15: #{tpu_custom_call.1} parent=11 // pred_region
          %s173 = ssub.s32 128, 128
          %174 = vsyncadd [#allocation6], %s173
          %s175 = sshll.u32 [#allocation5], 4
          %s176 = int_to_ptr.vmem [resolvable:$true] %s175
          %181 = dma.hbm_to_vmem [thread:$0]  %s1, 128, %s176, [#allocation6], 64, 64, 4
        $region16: #{tpu_custom_call.1} parent=11 // pred_fallthru
          _
        // Predicated region
        $region17: #{tpu_custom_call.1} parent=11 // pred_check
          %p182 = pneg %p86
        $region18: #{tpu_custom_call.1} parent=11 // pred_check_branch
          %184 = sbr.rel (%p182) target = $region20
        $region19: #{tpu_custom_call.1} parent=11 // pred_region
          _
        $region20: #{tpu_custom_call.1} parent=11 // pred_fallthru
          _
        // Predicated region
        $region21: #{tpu_custom_call.1} parent=11 // pred_check
          %p185 = pneg %p107
        $region22: #{tpu_custom_call.1} parent=11 // pred_check_branch
          %187 = sbr.rel (%p185) target = $region24
        $region23: #{tpu_custom_call.1} parent=11 // pred_region
          %s189 = ssub.s32 512, 512
          %190 = vsyncadd [#allocation6], %s189
          %s191 = sshll.u32 [#allocation7], 4
          %s192 = int_to_ptr.vmem [resolvable:$true] %s191
          %197 = dma.hbm_to_vmem [thread:$0]  %s3, 512, %s192, [#allocation6], 64, 64, 4
        $region24: #{tpu_custom_call.1} parent=11 // pred_fallthru
          _
        // Predicated region
        $region25: #{tpu_custom_call.1} parent=11 // pred_check
          %p198 = pneg %p128
        $region26: #{tpu_custom_call.1} parent=11 // pred_check_branch
          %200 = sbr.rel (%p198) target = $region28
        $region27: #{tpu_custom_call.1} parent=11 // pred_region
          _
        $region28: #{tpu_custom_call.1} parent=11 // pred_fallthru
          _
      $region12: #{tpu_custom_call.1} parent=5 // pred_fallthru
        _
      %p201 = scmp.lt.s32.totalorder %s18, 2
      // Predicated region
      $region29: #{tpu_custom_call.1} parent=5 // pred_check
        %p202 = pneg %p201
      $region30: #{tpu_custom_call.1} parent=5 // pred_check_branch
        %204 = sbr.rel (%p202) target = $region32
      $region31: #{tpu_custom_call.1} parent=5 // pred_region
        // Predicated region
        $region33: #{tpu_custom_call.1} parent=31 // pred_check
          %p205 = pneg %p38
        $region34: #{tpu_custom_call.1} parent=31 // pred_check_branch
          %207 = sbr.rel (%p205) target = $region36
        $region35: #{tpu_custom_call.1} parent=31 // pred_region
          %s208 = sand.u32 %s28, 1
          %s209 = scalar_lea.sflag [#allocation3], %s208
          %s210 = sand.u32 %s28, 1
          %s211 = smul.addr %s210, 4
          %s212 = scalar_lea.vmem [#allocation2], %s211
          %s214 = ssub.s32 64, 64
          %215 = vsyncadd %s209, %s214
          %s216 = smul.addr %s18, 64
          %s217 = scalar_lea.hbm %s0, %s216
          %s219 = sshll.u32 %s212, 4
          %s220 = int_to_ptr.vmem [resolvable:$true] %s219
          %222 = dma.hbm_to_vmem [thread:$0]  %s217, 64, %s220, %s209
        $region36: #{tpu_custom_call.1} parent=31 // pred_fallthru
          _
      $region32: #{tpu_custom_call.1} parent=5 // pred_fallthru
        _
      %p223 = scmp.le.s32.totalorder 1, %s18
      %p224 = scmp.lt.s32.totalorder %s18, 3
      %p225 = pnand %p223, %p224
      %p226 = pneg %p225
      // Predicated region
      $region37: #{tpu_custom_call.1} parent=5 // pred_check
        _
      $region38: #{tpu_custom_call.1} parent=5 // pred_check_branch
        %228 = sbr.rel (%p225) target = $region40
      $region39: #{tpu_custom_call.1} parent=5 // pred_region
        %s229 = ssub.s32 %s18, 1
        %s230 = sand.u32 %s31, 1
        %s231 = scalar_lea.sflag [#allocation3], %s230
        %s232 = sand.u32 %s31, 1
        %s233 = smul.addr %s232, 4
        %s234 = scalar_lea.vmem [#allocation2], %s233
        // Predicated region
        $region41: #{tpu_custom_call.1} parent=39 // pred_check
          %p235 = pneg %p44
        $region42: #{tpu_custom_call.1} parent=39 // pred_check_branch
          %237 = sbr.rel (%p235) target = $region44
        $region43: #{tpu_custom_call.1} parent=39 // pred_region
          %238 = dma.done %s231, 64
        $region44: #{tpu_custom_call.1} parent=39 // pred_fallthru
          _
        // Predicated region
        $region45: #{tpu_custom_call.1} parent=39 // pred_check
          %p239 = pneg %p65
        $region46: #{tpu_custom_call.1} parent=39 // pred_check_branch
          %241 = sbr.rel (%p239) target = $region48
        $region47: #{tpu_custom_call.1} parent=39 // pred_region
          %242 = dma.done [#allocation6], 128
        $region48: #{tpu_custom_call.1} parent=39 // pred_fallthru
          _
        // Predicated region
        $region49: #{tpu_custom_call.1} parent=39 // pred_check
          %p243 = pneg %p107
        $region50: #{tpu_custom_call.1} parent=39 // pred_check_branch
          %245 = sbr.rel (%p243) target = $region52
        $region51: #{tpu_custom_call.1} parent=39 // pred_region
          %246 = dma.done [#allocation6], 512
        $region52: #{tpu_custom_call.1} parent=39 // pred_fallthru
          _
        %s247 = sand.u32 %s31, 1
        %s248 = scalar_lea.sflag [#allocation3], %s247
        %s249 = sand.u32 %s31, 1
        %s250 = smul.addr %s249, 4
        %s251 = scalar_lea.vmem [#allocation2], %s250
        %p252 = pneg %p44
        %p253 = pneg %p41
        %p254 = pneg %p65
        %p255 = pneg %p62
        %p256 = pneg %p86
        %p257 = pneg %p83
        %p258 = pneg %p107
        %p259 = pneg %p104
        %p260 = pneg %p128
        %p261 = pneg %p125
        %p262 = pneg %p154
        %p263 = pneg %p151
        %s264 = sand.u32 %s141, 1
        %s265 = scalar_lea.sflag [#allocation4], %s264
        %s266 = sand.u32 %s141, 1
        %s267 = smul.addr %s266, 8
        %s268 = scalar_lea.vmem [#allocation8], %s267
        %v270 = vld [vmem:[%s234] sm:$0xf]
        %v271 = vld [vmem:[#allocation5] sm:$0xf]
        %v272 = vld [vmem:[#allocation5 + $0x4] sm:$0x1]
        %v273 = vld [vmem:[%s2] sm:$0x1]
        %v275 = vlaneseq
        %v276 = vshrl.u32 %v275, 7
        %v277 = vsub.s32 0, %v276
        %v278 = vrot.slane %v273, %v277
        %v282 = vunpack.c.l.b16 %v271
        %v283 = vunpack.c.l.b16 %v272
        %v284 = vpack.c.b16 %v283, %v282
        %vm285 = vcmask 80896
        %v287 = vsel %vm285, %v270, 0
        %vm289 = vcmask 1044480
        %v291 = vsel %vm289, %v284, 0
        %293 = vmatprep.subr.bf16.mxu0 0
        %294 = vmatpush1.bf16.msra.mxu0 %v291
        %295 = vmatprep.subr.bf16.mxu0 0
        %296 = vmatpush1.bf16.msra.mxu0 0
        %297 = vmatprep.subr.bf16.mxu0 0
        %298 = vmatpush1.bf16.msra.mxu0 0
        %299 = vmatprep.subr.bf16.mxu0 0
        %300 = vmatpush1.bf16.msra.mxu0 0
        %301 = vmatprep.subr.bf16.mxu0 0
        %302 = vmatpush1.bf16.msra.mxu0 0
        %303 = vmatprep.subr.bf16.mxu0 0
        %304 = vmatpush1.bf16.msra.mxu0 0
        %305 = vmatprep.subr.bf16.mxu0 0
        %306 = vmatpush1.bf16.msra.mxu0 0
        %307 = vmatprep.subr.bf16.mxu0 0
        %308 = vmatpush1.bf16.msra.mxu0 0
        %309 = vmatprep.subr.bf16.mxu0 0
        %310 = vmatpush1.bf16.msra.mxu0 0
        %311 = vmatprep.subr.bf16.mxu0 0
        %312 = vmatpush1.bf16.msra.mxu0 0
        %313 = vmatprep.subr.bf16.mxu0 0
        %314 = vmatpush1.bf16.msra.mxu0 0
        %315 = vmatprep.subr.bf16.mxu0 0
        %316 = vmatpush1.bf16.msra.mxu0 0
        %317 = vmatprep.subr.bf16.mxu0 0
        %318 = vmatpush1.bf16.msra.mxu0 0
        %319 = vmatprep.subr.bf16.mxu0 0
        %320 = vmatpush1.bf16.msra.mxu0 0
        %321 = vmatprep.subr.bf16.mxu0 0
        %322 = vmatpush1.bf16.msra.mxu0 0
        %323 = vmatprep.subr.bf16.mxu0 0
        %324 = vmatpush1.bf16.msra.mxu0 0
        %325 = vmatprep.mubr.bf16.mxu0 0
        %326 = vmatmul.mubr.bf16.gmra.mrb[0].mxu0 %v287
        %v327 = vpop.f32.mrb[0].mxu0
        %v328 = vadd.f32 %v278, %v327
        %v329 = vpop.f32.mrb[0].mxu0
        %v330 = vpop.f32.mrb[0].mxu0
        %v331 = vpop.f32.mrb[0].mxu0
        %332 = vdwg.mxu0
        %vm333 = vcmp.gt.f32.partialorder %v328, 20.0
        %v334 = vsel %vm333, 0.0, %v328
        %v335 = vmul.f32 %v334, 1.442695
        %v336 = vpow.pop %v335
        %v337 = vadd.f32 %v336, 1.0
        %v338 = vlog2.pop %v337
        %v339 = vmul.f32 %v338, 0.6931472
        %v340 = vmul.f32 -0.5, %v336
        %v341 = vadd.f32 %v340, 1.0
        %v342 = vmul.f32 %v341, %v336
        %v343 = vand.u32 2147483647, %v336
        %vm344 = vcmp.lt.f32.partialorder %v343, 0.0004427343
        %v345 = vsel %vm344, %v342, %v339
        %v346 = vsel %vm333, %v328, %v345
        %v347 = vpack.c.bf16 %v346, %v346
        %v348 = vld [vmem:[#allocation7] sm:$0xf]
        %v349 = vld [vmem:[#allocation7 + $0x4] sm:$0xf]
        %v350 = vld [vmem:[#allocation7 + $0x8] sm:$0xf]
        %v351 = vld [vmem:[#allocation7 + $0xc] sm:$0xf]
        %v352 = vld [vmem:[#allocation7 + $0x10] sm:$0xf]
        %v353 = vld [vmem:[#allocation7 + $0x14] sm:$0xf]
        %v354 = vld [vmem:[#allocation7 + $0x18] sm:$0xf]
        %v355 = vld [vmem:[#allocation7 + $0x1c] sm:$0xf]
        %v356 = vld [vmem:[%s4] sm:$0x1]
        %v358 = vlaneseq
        %v359 = vshrl.u32 %v358, 7
        %v360 = vsub.s32 0, %v359
        %v361 = vrot.slane %v356, %v360
        %v371 = vunpack.c.l.b16 %v348
        %v372 = vunpack.c.l.b16 %v349
        %v373 = vunpack.c.l.b16 %v350
        %v374 = vunpack.c.l.b16 %v351
        %v375 = vunpack.c.l.b16 %v352
        %v376 = vunpack.c.l.b16 %v353
        %v377 = vunpack.c.l.b16 %v354
        %v378 = vunpack.c.l.b16 %v355
        %v379 = vpack.c.b16 %v372, %v371
        %v380 = vpack.c.b16 %v374, %v373
        %v381 = vpack.c.b16 %v376, %v375
        %v382 = vpack.c.b16 %v378, %v377
        %vm387 = vcmask 523264
        %v389 = vsel %vm387, %v347, 0
        %391 = vmatprep.subr.bf16.mxu0 0
        %392 = vmatpush1.bf16.msra.mxu0 %v379
        %393 = vmatprep.subr.bf16.mxu0 0
        %394 = vmatpush1.bf16.msra.mxu0 %v380
        %395 = vmatprep.subr.bf16.mxu0 0
        %396 = vmatpush1.bf16.msra.mxu0 %v381
        %397 = vmatprep.subr.bf16.mxu0 0
        %398 = vmatpush1.bf16.msra.mxu0 %v382
        %399 = vmatprep.subr.bf16.mxu0 0
        %400 = vmatpush1.bf16.msra.mxu0 0
        %401 = vmatprep.subr.bf16.mxu0 0
        %402 = vmatpush1.bf16.msra.mxu0 0
        %403 = vmatprep.subr.bf16.mxu0 0
        %404 = vmatpush1.bf16.msra.mxu0 0
        %405 = vmatprep.subr.bf16.mxu0 0
        %406 = vmatpush1.bf16.msra.mxu0 0
        %407 = vmatprep.subr.bf16.mxu0 0
        %408 = vmatpush1.bf16.msra.mxu0 0
        %409 = vmatprep.subr.bf16.mxu0 0
        %410 = vmatpush1.bf16.msra.mxu0 0
        %411 = vmatprep.subr.bf16.mxu0 0
        %412 = vmatpush1.bf16.msra.mxu0 0
        %413 = vmatprep.subr.bf16.mxu0 0
        %414 = vmatpush1.bf16.msra.mxu0 0
        %415 = vmatprep.subr.bf16.mxu0 0
        %416 = vmatpush1.bf16.msra.mxu0 0
        %417 = vmatprep.subr.bf16.mxu0 0
        %418 = vmatpush1.bf16.msra.mxu0 0
        %419 = vmatprep.subr.bf16.mxu0 0
        %420 = vmatpush1.bf16.msra.mxu0 0
        %421 = vmatprep.subr.bf16.mxu0 0
        %422 = vmatpush1.bf16.msra.mxu0 0
        %423 = vmatprep.mubr.bf16.mxu0 0
        %424 = vmatmul.mubr.bf16.gmra.mrb[0].mxu0 %v389
        %v425 = vpop.f32.mrb[0].mxu0
        %v426 = vadd.f32 %v361, %v425
        %v427 = vpop.f32.mrb[0].mxu0
        %v428 = vpop.f32.mrb[0].mxu0
        %v429 = vpop.f32.mrb[0].mxu0
        %430 = vdwg.mxu0
        %v431 = vlaneseq
        %v432 = vand.u32 %v431, 127
        %vm433 = vcmp.ge.s32.totalorder %v432, 16
        %vm434 = vcmp.gt.f32.partialorder %v426, 20.0
        %v435 = vsel %vm434, 0.0, %v426
        %v436 = vmul.f32 %v435, 1.442695
        %v437 = vpow.pop %v436
        %v438 = vadd.f32 %v437, 1.0
        %v439 = vlog2.pop %v438
        %v440 = vmul.f32 %v439, 0.6931472
        %v441 = vmul.f32 -0.5, %v437
        %v442 = vadd.f32 %v441, 1.0
        %v443 = vmul.f32 %v442, %v437
        %v444 = vand.u32 2147483647, %v437
        %vm445 = vcmp.lt.f32.partialorder %v444, 0.0004427343
        %v446 = vsel %vm445, %v443, %v440
        %v447 = vsel %vm434, %v426, %v446
        %v448 = vsel %vm433, %v447, %v426
        %449 = vst [vmem:[%s268] sm:$0xff] %v448
        %s450 = sand.u32 %s141, 1
        %s451 = scalar_lea.sflag [#allocation4], %s450
        %s452 = sand.u32 %s141, 1
        %s453 = smul.addr %s452, 8
        %s454 = scalar_lea.vmem [#allocation8], %s453
        // Predicated region
        $region53: #{tpu_custom_call.1} parent=39 // pred_check
          %p455 = pneg %p151
        $region54: #{tpu_custom_call.1} parent=39 // pred_check_branch
          %457 = sbr.rel (%p455) target = $region56
        $region55: #{tpu_custom_call.1} parent=39 // pred_region
          %s459 = ssub.s32 128, 128
          %460 = vsyncadd %s451, %s459
          %s461 = smul.addr %s23, 128
          %s462 = scalar_lea.hbm %s5, %s461
          %s464 = sshll.u32 %s454, 4
          %s465 = int_to_ptr.vmem [resolvable:$true] %s464
          %467 = dma.vmem_to_hbm [thread:$0]  %s465, 128, %s462, %s451
        $region56: #{tpu_custom_call.1} parent=39 // pred_fallthru
          _
      $region40: #{tpu_custom_call.1} parent=5 // pred_fallthru
        _
      %p468 = scmp.le.s32.totalorder 2, %s18
      // Predicated region
      $region57: #{tpu_custom_call.1} parent=5 // pred_check
        %p469 = pneg %p468
      $region58: #{tpu_custom_call.1} parent=5 // pred_check_branch
        %471 = sbr.rel (%p469) target = $region60
      $region59: #{tpu_custom_call.1} parent=5 // pred_region
        %s472 = ssub.s32 %s18, 2
        // Predicated region
        $region61: #{tpu_custom_call.1} parent=59 // pred_check
          %p473 = pneg %p157
        $region62: #{tpu_custom_call.1} parent=59 // pred_check_branch
          %475 = sbr.rel (%p473) target = $region64
        $region63: #{tpu_custom_call.1} parent=59 // pred_region
          %s476 = sand.u32 %s142, 1
          %s477 = scalar_lea.sflag [#allocation4], %s476
          %s478 = sand.u32 %s142, 1
          %s479 = smul.addr %s478, 8
          %s480 = scalar_lea.vmem [#allocation8], %s479
          %481 = dma.done %s477, 128
        $region64: #{tpu_custom_call.1} parent=59 // pred_fallthru
          _
      $region60: #{tpu_custom_call.1} parent=5 // pred_fallthru
        _
    $region6: #{tpu_custom_call.1} parent=1 // loop_footer
      %s22 = sadd.s32 1, %s18
    $region7: #{tpu_custom_call.1} parent=1 // loop_footer_branch
      %17 = sbr.rel target = $region3
    $region8: #{tpu_custom_call.1} parent=1 // loop_exit
      _
    %482 = vsyncpa [#allocation3], 1
    %s483 = scalar_lea.sflag [#allocation3], 1
    %484 = vsyncpa %s483, 1
    %485 = vsyncpa [#allocation6], 1
    %486 = vsyncpa [#allocation4], 1
    %s487 = scalar_lea.sflag [#allocation4], 1
    %488 = vsyncpa %s487, 1

</llo_original>
